<compile_context>
chip_gen: v7x
topology: tpu7x:2x2x1
jax: 0.10.0
libtpu: 0.0.40
codegen_flags: <defaults>
</compile_context>

<pallas_src>
import functools

import numpy as np
import jax
import jax.numpy as jnp
from jax.experimental import pallas as pl
from jax.experimental.pallas import tpu as pltpu


# ---------------------------------------------------------------------------
# In-kernel helpers
# ---------------------------------------------------------------------------

def _conv1x1(w, a, b):
    """1x1 conv: (Cout, Cin) @ (Cin, L) + bias (Cout, 1)."""
    return jnp.dot(w, a, preferred_element_type=jnp.float32) + b


def _dw3x3(a, wdw, b, masks, img_w):
    """Depthwise 3x3 conv, stride 1, zero padding 1, over batch-folded lanes.

    a:     (C, L) f32 activation, L = B_blk * H * W (row-major spatial per image)
    wdw:   (C, 9) per-channel taps, tap index k = kh*3 + kw
    b:     (C, 1) bias
    masks: (9, L) precomputed 0/1 f32 boundary masks (per-image, derived from
           p % hw, so any roll across an image/batch seam is zeroed)
    Spatial shifts are lane rolls (XLU); padding handled by the mask multiply
    (VPU). No shift-matrix constants, no MXU work.
    """
    L = a.shape[1]
    acc = jnp.zeros_like(a)
    for kh in range(3):
        for kw in range(3):
            k = kh * 3 + kw
            s = (kh - 1) * img_w + (kw - 1)          # flat-index shift of this tap
            shifted = a if s == 0 else pltpu.roll(a, (-s) % L, axis=1)
            if s != 0:                                # center tap needs no mask
                shifted = shifted * masks[k:k + 1, :]
            acc = acc + wdw[:, k:k + 1] * shifted
    return acc + b


# ---------------------------------------------------------------------------
# Kernels
# ---------------------------------------------------------------------------

def _shuffle_nds_kernel(x_ref, masks_ref, w1_ref, b1_ref, wdw2_ref, bdw2_ref,
                        w3_ref, b3_ref, out_ref, *, img_w, mid):
    """downsample=False branch. All refs are 2-D (squeezed leading block dim)."""
    x = x_ref[...]                                   # (2*mid, L)
    masks = masks_ref[...]                           # (9, L)
    y1 = x[:mid, :]                                  # torch.chunk, first half
    x2 = x[mid:, :]                                  # torch.chunk, second half

    y2 = jnp.maximum(_conv1x1(w1_ref[...], x2, b1_ref[...]), 0.0)       # compress_conv1 + ReLU
    y2 = _dw3x3(y2, wdw2_ref[...], bdw2_ref[...], masks, img_w)         # dw_conv2 (stride 1)
    y2 = jnp.maximum(_conv1x1(w3_ref[...], y2, b3_ref[...]), 0.0)       # expand_conv3 + ReLU

    out_ref[:mid, :] = y1                            # torch.cat along channels
    out_ref[mid:, :] = y2 + x2                       # residual add


def _shuffle_ds_kernel(x_ref, masks_ref, psel_ref, w1_ref, b1_ref,
                       wdw2_ref, bdw2_ref, w3_ref, b3_ref,
                       wdw4_ref, bdw4_ref, w5_ref, b5_ref,
                       out_ref, *, img_w, mid):
    """downsample=True branch."""
    x = x_ref[...]                                   # (Cin, L)
    masks = masks_ref[...]                           # (9, L), shared by both dw convs
    psel = psel_ref[...]                             # (L, Lo) block-diag stride-2 selector

    # branch 1: dw_conv4 (stride 2) -> expand_conv5 (1x1) -> ReLU
    y1 = _dw3x3(x, wdw4_ref[...], bdw4_ref[...], masks, img_w)
    y1 = jnp.dot(y1, psel, preferred_element_type=jnp.float32)          # subsample H,W by 2
    y1 = jnp.maximum(_conv1x1(w5_ref[...], y1, b5_ref[...]), 0.0)

    # branch 2: compress_conv1 -> ReLU -> dw_conv2 (stride 2) -> expand_conv3 -> ReLU
    y2 = jnp.maximum(_conv1x1(w1_ref[...], x, b1_ref[...]), 0.0)
    y2 = _dw3x3(y2, wdw2_ref[...], bdw2_ref[...], masks, img_w)
    y2 = jnp.dot(y2, psel, preferred_element_type=jnp.float32)
    y2 = jnp.maximum(_conv1x1(w3_ref[...], y2, b3_ref[...]), 0.0)

    out_ref[:mid, :] = y1                            # torch.cat along channels
    out_ref[mid:, :] = y2


# ---------------------------------------------------------------------------
# Host-side constants
# ---------------------------------------------------------------------------

def _make_tap_masks(h, w, b_blk):
    """(9, B_blk*H*W) 0/1 masks zeroing taps whose source lies outside the image."""
    hw = h * w
    p = np.arange(b_blk * hw) % hw                   # per-image flat position
    r, c = p // w, p % w
    m = np.zeros((9, b_blk * hw), np.float32)
    for kh in range(3):
        for kw in range(3):
            dh, dw = kh - 1, kw - 1
            ok = (r + dh >= 0) & (r + dh <= h - 1) & (c + dw >= 0) & (c + dw <= w - 1)
            m[kh * 3 + kw] = ok.astype(np.float32)
    return m


def _make_subsample_matrix(h, w, b_blk):
    """Block-diagonal (B_blk*HW, B_blk*Ho*Wo) 0/1 operator selecting stride-2 output centers."""
    ho, wo = (h - 1) // 2 + 1, (w - 1) // 2 + 1
    hw, hwo = h * w, ho * wo
    ps = np.zeros((b_blk * hw, b_blk * hwo), np.float32)
    for bi in range(b_blk):
        for oi in range(ho):
            for oj in range(wo):
                ps[bi * hw + (2 * oi) * w + (2 * oj), bi * hwo + oi * wo + oj] = 1.0
    return ps


# ---------------------------------------------------------------------------
# Wrapper
# ---------------------------------------------------------------------------

@functools.partial(jax.jit, static_argnames=("downsample", "batch_block", "core_parallel"))
def shuffle_unit_forward(x, params, *, downsample, batch_block=None, core_parallel=False):
    """x: (N, Cin, H, W) float32 NCHW (as in PyTorch). Returns NCHW output.

    batch_block: how many batch elements are folded into the lane axis per grid
      step (default: all of them -> single grid step on 1-TC chips).
    core_parallel: on v7x, set batch_block=n//2 and core_parallel=True to split
      the batch grid axis across the two TensorCores.
    """
    n, cin, h, w = x.shape
    hw = h * w
    b_blk = n if batch_block is None else batch_block
    assert n % b_blk == 0, "batch_block must divide batch size"
    nb = n // b_blk
    L = b_blk * hw

    # Fold batch into lanes: (nb, Cin, B_blk*HW), channels on sublanes.
    x_fold = (x.astype(jnp.float32)
              .reshape(nb, b_blk, cin, hw)
              .transpose(0, 2, 1, 3)
              .reshape(nb, cin, L))

    masks = jnp.asarray(_make_tap_masks(h, w, b_blk))       # (9, L)

    if downsample:
        (w1, b1), (wdw2, bdw2), (w3, b3), (wdw4, bdw4), (w5, b5) = params
        mid = w1.shape[0]
        cout = 2 * mid
        ho, wo = (h - 1) // 2 + 1, (w - 1) // 2 + 1
        hwo = ho * wo
        Lo = b_blk * hwo
        psel = jnp.asarray(_make_subsample_matrix(h, w, b_blk))
        args = (x_fold, masks, psel,
                w1.reshape(mid, cin), b1.reshape(mid, 1),
                wdw2.reshape(mid, 9), bdw2.reshape(mid, 1),
                w3.reshape(mid, mid), b3.reshape(mid, 1),
                wdw4.reshape(cin, 9), bdw4.reshape(cin, 1),
                w5.reshape(mid, cin), b5.reshape(mid, 1))
        kernel = functools.partial(_shuffle_ds_kernel, img_w=w, mid=mid)
    else:
        (w1, b1), (wdw2, bdw2), (w3, b3) = params
        mid = w1.shape[0]
        cout = 2 * mid
        ho, wo, hwo = h, w, hw
        Lo = L
        args = (x_fold, masks,
                w1.reshape(mid, mid), b1.reshape(mid, 1),
                wdw2.reshape(mid, 9), bdw2.reshape(mid, 1),
                w3.reshape(mid, mid), b3.reshape(mid, 1))
        kernel = functools.partial(_shuffle_nds_kernel, img_w=w, mid=mid)

    # Activation/output: squeezed leading block dim -> 2-D refs in the kernel.
    in_specs = [pl.BlockSpec((None, cin, L), lambda b: (b, 0, 0))]
    # Constants (masks, psel, weights, biases): fetched whole, same block every step.
    in_specs += [pl.BlockSpec(a.shape, lambda b: (0, 0)) for a in args[1:]]

    dim_sem = (pltpu.CORE_PARALLEL,) if core_parallel else ("parallel",)

    out = pl.pallas_call(
        kernel,
        out_shape=jax.ShapeDtypeStruct((nb, cout, Lo), jnp.float32),
        grid=(nb,),
        in_specs=in_specs,
        out_specs=pl.BlockSpec((None, cout, Lo), lambda b: (b, 0, 0)),
        compiler_params=pltpu.CompilerParams(dimension_semantics=dim_sem),
    )(*args)

    # Unfold batch from lanes back to NCHW.
    return (out.reshape(nb, cout, b_blk, hwo)
               .transpose(0, 2, 1, 3)
               .reshape(n, cout, ho, wo))


# ---------------------------------------------------------------------------
# Plain-JAX reference (replicates the PyTorch forward)
# ---------------------------------------------------------------------------

def _conv2d_ref(x, wt, b, stride, padding, groups=1):
    y = jax.lax.conv_general_dilated(
        x, wt, window_strides=(stride, stride),
        padding=[(padding, padding), (padding, padding)],
        dimension_numbers=('NCHW', 'OIHW', 'NCHW'),
        feature_group_count=groups)
    return y + b.reshape(1, -1, 1, 1)


def shuffle_unit_ref(x, params, *, downsample):
    if downsample:
        (w1, b1), (wdw2, bdw2), (w3, b3), (wdw4, bdw4), (w5, b5) = params
        cin = x.shape[1]
        y1 = _conv2d_ref(x, wdw4, bdw4, stride=2, padding=1, groups=cin)
        y1 = jnp.maximum(_conv2d_ref(y1, w5, b5, stride=1, padding=0), 0.0)
        x2 = x
        dw_stride = 2
    else:
        (w1, b1), (wdw2, bdw2), (w3, b3) = params
        half = x.shape[1] // 2
        y1, x2 = x[:, :half], x[:, half:]
        dw_stride = 1
    mid = w1.shape[0]
    y2 = jnp.maximum(_conv2d_ref(x2, w1, b1, stride=1, padding=0), 0.0)
    y2 = _conv2d_ref(y2, wdw2, bdw2, stride=dw_stride, padding=1, groups=mid)
    y2 = jnp.maximum(_conv2d_ref(y2, w3, b3, stride=1, padding=0), 0.0)
    if not downsample:
        y2 = y2 + x2
    return jnp.concatenate([y1, y2], axis=1)


def _init_params(key, in_ch, out_ch, downsample):
    mid = out_ch // 2
    cin1 = in_ch if downsample else mid
    ks = jax.random.split(key, 10)
    nrm = lambda k, shape: 0.1 * jax.random.normal(k, shape, jnp.float32)
    p = [
        (nrm(ks[0], (mid, cin1, 1, 1)), nrm(ks[1], (mid,))),        # compress_conv1
        (nrm(ks[2], (mid, 1, 3, 3)),    nrm(ks[3], (mid,))),        # dw_conv2
        (nrm(ks[4], (mid, mid, 1, 1)),  nrm(ks[5], (mid,))),        # expand_conv3
    ]
    if downsample:
        p += [
            (nrm(ks[6], (in_ch, 1, 3, 3)),   nrm(ks[7], (in_ch,))),  # dw_conv4
            (nrm(ks[8], (mid, in_ch, 1, 1)), nrm(ks[9], (mid,))),    # expand_conv5
        ]
    return tuple(p)


if __name__ == "__main__":
    key = jax.random.PRNGKey(0)
    k_p1, k_p2, k_x1, k_x2 = jax.random.split(key, 4)

    # downsample=False unit: in=out=16 channels, 16x16 spatial, batch 2.
    params_nds = _init_params(k_p1, in_ch=16, out_ch=16, downsample=False)
    x_nds = jax.random.normal(k_x1, (2, 16, 16, 16), jnp.float32)       # NCHW
    out_nds = jax.block_until_ready(
        shuffle_unit_forward(x_nds, params_nds, downsample=False))
    ref_nds = shuffle_unit_ref(x_nds, params_nds, downsample=False)
    np.testing.assert_allclose(np.asarray(out_nds), np.asarray(ref_nds),
                               rtol=1e-3, atol=1e-4)

    # downsample=True unit: in=16 -> out=32 channels, 16x16 -> 8x8 spatial, batch 2.
    params_ds = _init_params(k_p2, in_ch=16, out_ch=32, downsample=True)
    x_ds = jax.random.normal(k_x2, (2, 16, 16, 16), jnp.float32)        # NCHW
    out_ds = jax.block_until_ready(
        shuffle_unit_forward(x_ds, params_ds, downsample=True))
    ref_ds = shuffle_unit_ref(x_ds, params_ds, downsample=True)
    np.testing.assert_allclose(np.asarray(out_ds), np.asarray(ref_ds),
                               rtol=1e-3, atol=1e-4)

    print("KERNEL_OK")
</pallas_src>

<mosaic_0001>
module attributes {stable_mosaic.version = 11 : i64} {
  func.func @_shuffle_nds_kernel(%arg0: i32, %arg1: memref<1x16x512xf32, #tpu.memory_space<vmem>>, %arg2: memref<9x512xf32, #tpu.memory_space<vmem>>, %arg3: memref<8x8xf32, #tpu.memory_space<vmem>>, %arg4: memref<8x1xf32, #tpu.memory_space<vmem>>, %arg5: memref<8x9xf32, #tpu.memory_space<vmem>>, %arg6: memref<8x1xf32, #tpu.memory_space<vmem>>, %arg7: memref<8x8xf32, #tpu.memory_space<vmem>>, %arg8: memref<8x1xf32, #tpu.memory_space<vmem>>, %arg9: memref<1x16x512xf32, #tpu.memory_space<vmem>>) attributes {dimension_semantics = [#tpu.dimension_semantics<parallel>], iteration_bounds = array<i64: 1>, scalar_prefetch = 0 : i64, scratch_operands = 0 : i64, tpu.core_type = #tpu.core_type<tc>, window_params = [{transform_indices = @transform_0, window_bounds = array<i64: 1, 16, 512>}, {pipeline_mode = #tpu.pipeline_mode<synchronous>, transform_indices = @transform_1, window_bounds = array<i64: 9, 512>}, {pipeline_mode = #tpu.pipeline_mode<synchronous>, transform_indices = @transform_2, window_bounds = array<i64: 8, 8>}, {pipeline_mode = #tpu.pipeline_mode<synchronous>, transform_indices = @transform_3, window_bounds = array<i64: 8, 1>}, {pipeline_mode = #tpu.pipeline_mode<synchronous>, transform_indices = @transform_4, window_bounds = array<i64: 8, 9>}, {pipeline_mode = #tpu.pipeline_mode<synchronous>, transform_indices = @transform_5, window_bounds = array<i64: 8, 1>}, {pipeline_mode = #tpu.pipeline_mode<synchronous>, transform_indices = @transform_6, window_bounds = array<i64: 8, 8>}, {pipeline_mode = #tpu.pipeline_mode<synchronous>, transform_indices = @transform_7, window_bounds = array<i64: 8, 1>}, {transform_indices = @transform_8, window_bounds = array<i64: 1, 16, 512>}]} {
    %c0 = arith.constant 0 : index
    %c0_0 = arith.constant 0 : index
    %c0_1 = arith.constant 0 : index
    %0 = vector.load %arg1[%c0, %c0_0, %c0_1] : memref<1x16x512xf32, #tpu.memory_space<vmem>>, vector<1x16x512xf32>
    %1 = vector.shape_cast %0 : vector<1x16x512xf32> to vector<16x512xf32>
    %c0_2 = arith.constant 0 : index
    %c0_3 = arith.constant 0 : index
    %2 = vector.load %arg2[%c0_2, %c0_3] : memref<9x512xf32, #tpu.memory_space<vmem>>, vector<9x512xf32>
    %3 = vector.extract_strided_slice %1 {offsets = [0, 0], sizes = [8, 512], strides = [1, 1]} : vector<16x512xf32> to vector<8x512xf32>
    %4 = vector.extract_strided_slice %1 {offsets = [8, 0], sizes = [8, 512], strides = [1, 1]} : vector<16x512xf32> to vector<8x512xf32>
    %c0_4 = arith.constant 0 : index
    %c0_5 = arith.constant 0 : index
    %5 = vector.load %arg3[%c0_4, %c0_5] : memref<8x8xf32, #tpu.memory_space<vmem>>, vector<8x8xf32>
    %c0_6 = arith.constant 0 : index
    %c0_7 = arith.constant 0 : index
    %6 = vector.load %arg4[%c0_6, %c0_7] : memref<8x1xf32, #tpu.memory_space<vmem>>, vector<8x1xf32>
    %cst = arith.constant dense<0.000000e+00> : vector<8x512xf32>
    %7 = tpu.matmul %5, %4, %cst {dimension_numbers = #tpu.dot_dimension_numbers<[1], [0], [0], [1], [0, 0, 1, 1], [], []>} : vector<8x8xf32>, vector<8x512xf32>, vector<8x512xf32> -> vector<8x512xf32>
    %8 = vector.broadcast %6 : vector<8x1xf32> to vector<8x512xf32>
    %9 = arith.addf %7, %8 : vector<8x512xf32>
    %cst_8 = arith.constant 0.000000e+00 : f32
    %10 = vector.broadcast %cst_8 : f32 to vector<8x512xf32>
    %11 = arith.maximumf %9, %10 : vector<8x512xf32>
    %c0_9 = arith.constant 0 : index
    %c0_10 = arith.constant 0 : index
    %12 = vector.load %arg5[%c0_9, %c0_10] : memref<8x9xf32, #tpu.memory_space<vmem>>, vector<8x9xf32>
    %c0_11 = arith.constant 0 : index
    %c0_12 = arith.constant 0 : index
    %13 = vector.load %arg6[%c0_11, %c0_12] : memref<8x1xf32, #tpu.memory_space<vmem>>, vector<8x1xf32>
    %cst_13 = arith.constant 0.000000e+00 : f32
    %14 = vector.broadcast %cst_13 : f32 to vector<8x512xf32>
    %c17_i32 = arith.constant 17 : i32
    %15 = tpu.dynamic_rotate %11 by %c17_i32 dim 1 : vector<8x512xf32>, i32 -> vector<8x512xf32>
    %16 = vector.extract_strided_slice %2 {offsets = [0, 0], sizes = [1, 512], strides = [1, 1]} : vector<9x512xf32> to vector<1x512xf32>
    %17 = vector.broadcast %16 : vector<1x512xf32> to vector<8x512xf32>
    %18 = arith.mulf %15, %17 : vector<8x512xf32>
    %19 = vector.extract_strided_slice %12 {offsets = [0, 0], sizes = [8, 1], strides = [1, 1]} : vector<8x9xf32> to vector<8x1xf32>
    %20 = vector.broadcast %19 : vector<8x1xf32> to vector<8x512xf32>
    %21 = arith.mulf %20, %18 : vector<8x512xf32>
    %22 = arith.addf %14, %21 : vector<8x512xf32>
    %c16_i32 = arith.constant 16 : i32
    %23 = tpu.dynamic_rotate %11 by %c16_i32 dim 1 : vector<8x512xf32>, i32 -> vector<8x512xf32>
    %24 = vector.extract_strided_slice %2 {offsets = [1, 0], sizes = [1, 512], strides = [1, 1]} : vector<9x512xf32> to vector<1x512xf32>
    %25 = vector.broadcast %24 : vector<1x512xf32> to vector<8x512xf32>
    %26 = arith.mulf %23, %25 : vector<8x512xf32>
    %27 = vector.extract_strided_slice %12 {offsets = [0, 1], sizes = [8, 1], strides = [1, 1]} : vector<8x9xf32> to vector<8x1xf32>
    %28 = vector.broadcast %27 : vector<8x1xf32> to vector<8x512xf32>
    %29 = arith.mulf %28, %26 : vector<8x512xf32>
    %30 = arith.addf %22, %29 : vector<8x512xf32>
    %c15_i32 = arith.constant 15 : i32
    %31 = tpu.dynamic_rotate %11 by %c15_i32 dim 1 : vector<8x512xf32>, i32 -> vector<8x512xf32>
    %32 = vector.extract_strided_slice %2 {offsets = [2, 0], sizes = [1, 512], strides = [1, 1]} : vector<9x512xf32> to vector<1x512xf32>
    %33 = vector.broadcast %32 : vector<1x512xf32> to vector<8x512xf32>
    %34 = arith.mulf %31, %33 : vector<8x512xf32>
    %35 = vector.extract_strided_slice %12 {offsets = [0, 2], sizes = [8, 1], strides = [1, 1]} : vector<8x9xf32> to vector<8x1xf32>
    %36 = vector.broadcast %35 : vector<8x1xf32> to vector<8x512xf32>
    %37 = arith.mulf %36, %34 : vector<8x512xf32>
    %38 = arith.addf %30, %37 : vector<8x512xf32>
    %c1_i32 = arith.constant 1 : i32
    %39 = tpu.dynamic_rotate %11 by %c1_i32 dim 1 : vector<8x512xf32>, i32 -> vector<8x512xf32>
    %40 = vector.extract_strided_slice %2 {offsets = [3, 0], sizes = [1, 512], strides = [1, 1]} : vector<9x512xf32> to vector<1x512xf32>
    %41 = vector.broadcast %40 : vector<1x512xf32> to vector<8x512xf32>
    %42 = arith.mulf %39, %41 : vector<8x512xf32>
    %43 = vector.extract_strided_slice %12 {offsets = [0, 3], sizes = [8, 1], strides = [1, 1]} : vector<8x9xf32> to vector<8x1xf32>
    %44 = vector.broadcast %43 : vector<8x1xf32> to vector<8x512xf32>
    %45 = arith.mulf %44, %42 : vector<8x512xf32>
    %46 = arith.addf %38, %45 : vector<8x512xf32>
    %47 = vector.extract_strided_slice %12 {offsets = [0, 4], sizes = [8, 1], strides = [1, 1]} : vector<8x9xf32> to vector<8x1xf32>
    %48 = vector.broadcast %47 : vector<8x1xf32> to vector<8x512xf32>
    %49 = arith.mulf %48, %11 : vector<8x512xf32>
    %50 = arith.addf %46, %49 : vector<8x512xf32>
    %c511_i32 = arith.constant 511 : i32
    %51 = tpu.dynamic_rotate %11 by %c511_i32 dim 1 : vector<8x512xf32>, i32 -> vector<8x512xf32>
    %52 = vector.extract_strided_slice %2 {offsets = [5, 0], sizes = [1, 512], strides = [1, 1]} : vector<9x512xf32> to vector<1x512xf32>
    %53 = vector.broadcast %52 : vector<1x512xf32> to vector<8x512xf32>
    %54 = arith.mulf %51, %53 : vector<8x512xf32>
    %55 = vector.extract_strided_slice %12 {offsets = [0, 5], sizes = [8, 1], strides = [1, 1]} : vector<8x9xf32> to vector<8x1xf32>
    %56 = vector.broadcast %55 : vector<8x1xf32> to vector<8x512xf32>
    %57 = arith.mulf %56, %54 : vector<8x512xf32>
    %58 = arith.addf %50, %57 : vector<8x512xf32>
    %c497_i32 = arith.constant 497 : i32
    %59 = tpu.dynamic_rotate %11 by %c497_i32 dim 1 : vector<8x512xf32>, i32 -> vector<8x512xf32>
    %60 = vector.extract_strided_slice %2 {offsets = [6, 0], sizes = [1, 512], strides = [1, 1]} : vector<9x512xf32> to vector<1x512xf32>
    %61 = vector.broadcast %60 : vector<1x512xf32> to vector<8x512xf32>
    %62 = arith.mulf %59, %61 : vector<8x512xf32>
    %63 = vector.extract_strided_slice %12 {offsets = [0, 6], sizes = [8, 1], strides = [1, 1]} : vector<8x9xf32> to vector<8x1xf32>
    %64 = vector.broadcast %63 : vector<8x1xf32> to vector<8x512xf32>
    %65 = arith.mulf %64, %62 : vector<8x512xf32>
    %66 = arith.addf %58, %65 : vector<8x512xf32>
    %c496_i32 = arith.constant 496 : i32
    %67 = tpu.dynamic_rotate %11 by %c496_i32 dim 1 : vector<8x512xf32>, i32 -> vector<8x512xf32>
    %68 = vector.extract_strided_slice %2 {offsets = [7, 0], sizes = [1, 512], strides = [1, 1]} : vector<9x512xf32> to vector<1x512xf32>
    %69 = vector.broadcast %68 : vector<1x512xf32> to vector<8x512xf32>
    %70 = arith.mulf %67, %69 : vector<8x512xf32>
    %71 = vector.extract_strided_slice %12 {offsets = [0, 7], sizes = [8, 1], strides = [1, 1]} : vector<8x9xf32> to vector<8x1xf32>
    %72 = vector.broadcast %71 : vector<8x1xf32> to vector<8x512xf32>
    %73 = arith.mulf %72, %70 : vector<8x512xf32>
    %74 = arith.addf %66, %73 : vector<8x512xf32>
    %c495_i32 = arith.constant 495 : i32
    %75 = tpu.dynamic_rotate %11 by %c495_i32 dim 1 : vector<8x512xf32>, i32 -> vector<8x512xf32>
    %76 = vector.extract_strided_slice %2 {offsets = [8, 0], sizes = [1, 512], strides = [1, 1]} : vector<9x512xf32> to vector<1x512xf32>
    %77 = vector.broadcast %76 : vector<1x512xf32> to vector<8x512xf32>
    %78 = arith.mulf %75, %77 : vector<8x512xf32>
    %79 = vector.extract_strided_slice %12 {offsets = [0, 8], sizes = [8, 1], strides = [1, 1]} : vector<8x9xf32> to vector<8x1xf32>
    %80 = vector.broadcast %79 : vector<8x1xf32> to vector<8x512xf32>
    %81 = arith.mulf %80, %78 : vector<8x512xf32>
    %82 = arith.addf %74, %81 : vector<8x512xf32>
    %83 = vector.broadcast %13 : vector<8x1xf32> to vector<8x512xf32>
    %84 = arith.addf %82, %83 : vector<8x512xf32>
    %c0_14 = arith.constant 0 : index
    %c0_15 = arith.constant 0 : index
    %85 = vector.load %arg7[%c0_14, %c0_15] : memref<8x8xf32, #tpu.memory_space<vmem>>, vector<8x8xf32>
    %c0_16 = arith.constant 0 : index
    %c0_17 = arith.constant 0 : index
    %86 = vector.load %arg8[%c0_16, %c0_17] : memref<8x1xf32, #tpu.memory_space<vmem>>, vector<8x1xf32>
    %cst_18 = arith.constant dense<0.000000e+00> : vector<8x512xf32>
    %87 = tpu.matmul %85, %84, %cst_18 {dimension_numbers = #tpu.dot_dimension_numbers<[1], [0], [0], [1], [0, 0, 1, 1], [], []>} : vector<8x8xf32>, vector<8x512xf32>, vector<8x512xf32> -> vector<8x512xf32>
    %88 = vector.broadcast %86 : vector<8x1xf32> to vector<8x512xf32>
    %89 = arith.addf %87, %88 : vector<8x512xf32>
    %cst_19 = arith.constant 0.000000e+00 : f32
    %90 = vector.broadcast %cst_19 : f32 to vector<8x512xf32>
    %91 = arith.maximumf %89, %90 : vector<8x512xf32>
    %c0_20 = arith.constant 0 : index
    %c0_21 = arith.constant 0 : index
    %c0_22 = arith.constant 0 : index
    %92 = vector.load %arg9[%c0_20, %c0_21, %c0_22] : memref<1x16x512xf32, #tpu.memory_space<vmem>>, vector<1x8x512xf32>
    %93 = vector.shape_cast %92 : vector<1x8x512xf32> to vector<8x512xf32>
    %94 = vector.shape_cast %3 : vector<8x512xf32> to vector<1x8x512xf32>
    tpu.vector_store %arg9[%c0_20, %c0_21, %c0_22], %94 {strides = array<i32>} : memref<1x16x512xf32, #tpu.memory_space<vmem>>, vector<1x8x512xf32>,
    %95 = arith.addf %91, %4 : vector<8x512xf32>
    %c0_23 = arith.constant 0 : index
    %c8 = arith.constant 8 : index
    %c0_24 = arith.constant 0 : index
    %96 = vector.load %arg9[%c0_23, %c8, %c0_24] : memref<1x16x512xf32, #tpu.memory_space<vmem>>, vector<1x8x512xf32>
    %97 = vector.shape_cast %96 : vector<1x8x512xf32> to vector<8x512xf32>
    %98 = vector.shape_cast %95 : vector<8x512xf32> to vector<1x8x512xf32>
    tpu.vector_store %arg9[%c0_23, %c8, %c0_24], %98 {strides = array<i32>} : memref<1x16x512xf32, #tpu.memory_space<vmem>>, vector<1x8x512xf32>,
    return
  }
  func.func @transform_0(%arg0: i32) -> (i32, i32, i32) {
    %c0_i32 = arith.constant 0 : i32
    %c0_i32_0 = arith.constant 0 : i32
    %c0_i32_1 = arith.constant 0 : i32
    return %arg0, %c0_i32, %c0_i32_0 : i32, i32, i32
  }
  func.func @transform_1(%arg0: i32) -> (i32, i32) {
    %c0_i32 = arith.constant 0 : i32
    %c0_i32_0 = arith.constant 0 : i32
    %c0_i32_1 = arith.constant 0 : i32
    return %c0_i32, %c0_i32_0 : i32, i32
  }
  func.func @transform_2(%arg0: i32) -> (i32, i32) {
    %c0_i32 = arith.constant 0 : i32
    %c0_i32_0 = arith.constant 0 : i32
    %c0_i32_1 = arith.constant 0 : i32
    return %c0_i32, %c0_i32_0 : i32, i32
  }
  func.func @transform_3(%arg0: i32) -> (i32, i32) {
    %c0_i32 = arith.constant 0 : i32
    %c0_i32_0 = arith.constant 0 : i32
    %c0_i32_1 = arith.constant 0 : i32
    return %c0_i32, %c0_i32_0 : i32, i32
  }
  func.func @transform_4(%arg0: i32) -> (i32, i32) {
    %c0_i32 = arith.constant 0 : i32
    %c0_i32_0 = arith.constant 0 : i32
    %c0_i32_1 = arith.constant 0 : i32
    return %c0_i32, %c0_i32_0 : i32, i32
  }
  func.func @transform_5(%arg0: i32) -> (i32, i32) {
    %c0_i32 = arith.constant 0 : i32
    %c0_i32_0 = arith.constant 0 : i32
    %c0_i32_1 = arith.constant 0 : i32
    return %c0_i32, %c0_i32_0 : i32, i32
  }
  func.func @transform_6(%arg0: i32) -> (i32, i32) {
    %c0_i32 = arith.constant 0 : i32
    %c0_i32_0 = arith.constant 0 : i32
    %c0_i32_1 = arith.constant 0 : i32
    return %c0_i32, %c0_i32_0 : i32, i32
  }
  func.func @transform_7(%arg0: i32) -> (i32, i32) {
    %c0_i32 = arith.constant 0 : i32
    %c0_i32_0 = arith.constant 0 : i32
    %c0_i32_1 = arith.constant 0 : i32
    return %c0_i32, %c0_i32_0 : i32, i32
  }
  func.func @transform_8(%arg0: i32) -> (i32, i32, i32) {
    %c0_i32 = arith.constant 0 : i32
    %c0_i32_0 = arith.constant 0 : i32
    %c0_i32_1 = arith.constant 0 : i32
    return %arg0, %c0_i32, %c0_i32_0 : i32, i32, i32
  }
}

</mosaic_0001>

<llo_original>
// kernel: shuffle_unit_forward.1
$region0: #{shuffle_unit_forward.1}
  #allocation0 [shape = 'u32[]', space=smem, size = 0x4, offset = 0x4, fixed_abs, tag = 'smem constant byte address 0x4 - core index']
  #allocation1 [shape = 'u32[144,128]{1,0:T(1,128)}', space=vmem, size = 0x12000, scoped, tag = 'internal scratch']
  %s0 = inlined_call_operand.vmem [shape: f32[1,16,512], index: 0, kind: input, shape index: {}]
  %s1 = inlined_call_operand.vmem [shape: f32[9,512], index: 1, kind: input, shape index: {}]
  %s2 = inlined_call_operand.vmem [shape: f32[8,8], index: 2, kind: input, shape index: {}]
  %s3 = inlined_call_operand.vmem [shape: f32[8,1], index: 3, kind: input, shape index: {}]
  %s4 = inlined_call_operand.vmem [shape: f32[8,9], index: 4, kind: input, shape index: {}]
  %s5 = inlined_call_operand.vmem [shape: f32[8,1], index: 5, kind: input, shape index: {}]
  %s6 = inlined_call_operand.vmem [shape: f32[8,8], index: 6, kind: input, shape index: {}]
  %s7 = inlined_call_operand.vmem [shape: f32[8,1], index: 7, kind: input, shape index: {}]
  %s8 = inlined_call_operand.vmem [shape: f32[1,16,512], index: 8, kind: output, shape index: {}]
  %s9 = sld [smem:[#allocation0]]
  $region42: #{shuffle_unit_forward.1} parent=0
    _
  %s11 = ssub.s32 1, %s9
  %s12 = scalar_select 0, %s11, %s9
  // Predicated region
  $region2: #{shuffle_unit_forward.1} parent=0 // pred_check
    _
  $region3: #{shuffle_unit_forward.1} parent=0 // pred_check_branch
    %14 = sbr.rel (0) target = $region5
  $region4: #{shuffle_unit_forward.1} parent=0 // pred_region
    _
  $region5: #{shuffle_unit_forward.1} parent=0 // pred_fallthru
    _
  // Predicated region
  $region6: #{shuffle_unit_forward.1} parent=0 // pred_check
    _
  $region7: #{shuffle_unit_forward.1} parent=0 // pred_check_branch
    %16 = sbr.rel (0) target = $region9
  $region8: #{shuffle_unit_forward.1} parent=0 // pred_region
    _
  $region9: #{shuffle_unit_forward.1} parent=0 // pred_fallthru
    _
  // Predicated region
  $region10: #{shuffle_unit_forward.1} parent=0 // pred_check
    _
  $region11: #{shuffle_unit_forward.1} parent=0 // pred_check_branch
    %18 = sbr.rel (0) target = $region13
  $region12: #{shuffle_unit_forward.1} parent=0 // pred_region
    _
  $region13: #{shuffle_unit_forward.1} parent=0 // pred_fallthru
    _
  // Predicated region
  $region14: #{shuffle_unit_forward.1} parent=0 // pred_check
    _
  $region15: #{shuffle_unit_forward.1} parent=0 // pred_check_branch
    %20 = sbr.rel (0) target = $region17
  $region16: #{shuffle_unit_forward.1} parent=0 // pred_region
    _
  $region17: #{shuffle_unit_forward.1} parent=0 // pred_fallthru
    _
  // Predicated region
  $region18: #{shuffle_unit_forward.1} parent=0 // pred_check
    _
  $region19: #{shuffle_unit_forward.1} parent=0 // pred_check_branch
    %22 = sbr.rel (0) target = $region21
  $region20: #{shuffle_unit_forward.1} parent=0 // pred_region
    _
  $region21: #{shuffle_unit_forward.1} parent=0 // pred_fallthru
    _
  // Predicated region
  $region22: #{shuffle_unit_forward.1} parent=0 // pred_check
    _
  $region23: #{shuffle_unit_forward.1} parent=0 // pred_check_branch
    %24 = sbr.rel (0) target = $region25
  $region24: #{shuffle_unit_forward.1} parent=0 // pred_region
    _
  $region25: #{shuffle_unit_forward.1} parent=0 // pred_fallthru
    _
  // Predicated region
  $region26: #{shuffle_unit_forward.1} parent=0 // pred_check
    _
  $region27: #{shuffle_unit_forward.1} parent=0 // pred_check_branch
    %26 = sbr.rel (0) target = $region29
  $region28: #{shuffle_unit_forward.1} parent=0 // pred_region
    _
  $region29: #{shuffle_unit_forward.1} parent=0 // pred_fallthru
    _
  // Predicated region
  $region30: #{shuffle_unit_forward.1} parent=0 // pred_check
    _
  $region31: #{shuffle_unit_forward.1} parent=0 // pred_check_branch
    %28 = sbr.rel (0) target = $region33
  $region32: #{shuffle_unit_forward.1} parent=0 // pred_region
    _
  $region33: #{shuffle_unit_forward.1} parent=0 // pred_fallthru
    _
  %v29 = vld [vmem:[%s0] sm:$0xff]
  %v30 = vld [vmem:[%s0 + $0x8] sm:$0xff]
  %v31 = vld [vmem:[%s0 + $0x10] sm:$0xff]
  %v32 = vld [vmem:[%s0 + $0x18] sm:$0xff]
  %v33 = vld [vmem:[%s0 + $0x20] sm:$0xff]
  %v34 = vld [vmem:[%s0 + $0x28] sm:$0xff]
  %v35 = vld [vmem:[%s0 + $0x30] sm:$0xff]
  %v36 = vld [vmem:[%s0 + $0x38] sm:$0xff]
  %v37 = vld [vmem:[%s1] sm:$0xff]
  %v38 = vld [vmem:[%s1 + $0x8] sm:$0xff]
  %v39 = vld [vmem:[%s1 + $0x10] sm:$0xff]
  %v40 = vld [vmem:[%s1 + $0x18] sm:$0xff]
  %v41 = vld [vmem:[%s1 + $0x20] sm:$0x1]
  %v42 = vld [vmem:[%s1 + $0x28] sm:$0x1]
  %v43 = vld [vmem:[%s1 + $0x30] sm:$0x1]
  %v44 = vld [vmem:[%s1 + $0x38] sm:$0x1]
  %v45 = vld [vmem:[%s2] sm:$0xff]
  %v46 = vld [vmem:[%s3] sm:$0xff]
  %48 = vset.pattern.permute.xlu0 0
  %49 = vperm.xlu0 %48, %v46
  %v50 = vpop.permute.xlu0 %49
  %vm52 = vcmask 64512
  %v54 = vsel %vm52, %v45, 0
  %56 = vmatprep.subr.mxu0 %v34
  %57 = vmatpush1.msra.mxu0 %v33
  %58 = vmatprep.subr.mxu0 0.0
  %59 = vmatpush1.msra.mxu0 0.0
  %60 = vmatprep.subr.mxu0 0.0
  %61 = vmatpush1.msra.mxu0 0.0
  %62 = vmatprep.subr.mxu0 0.0
  %63 = vmatpush1.msra.mxu0 0.0
  %64 = vmatprep.subr.mxu0 0.0
  %65 = vmatpush1.msra.mxu0 0.0
  %66 = vmatprep.subr.mxu0 0.0
  %67 = vmatpush1.msra.mxu0 0.0
  %68 = vmatprep.subr.mxu0 0.0
  %69 = vmatpush1.msra.mxu0 0.0
  %70 = vmatprep.subr.mxu0 0.0
  %71 = vmatpush1.msra.mxu0 0.0
  %72 = vmatprep.subr.mxu0 0.0
  %73 = vmatpush1.msra.mxu0 0.0
  %74 = vmatprep.subr.mxu0 0.0
  %75 = vmatpush1.msra.mxu0 0.0
  %76 = vmatprep.subr.mxu0 0.0
  %77 = vmatpush1.msra.mxu0 0.0
  %78 = vmatprep.subr.mxu0 0.0
  %79 = vmatpush1.msra.mxu0 0.0
  %80 = vmatprep.subr.mxu0 0.0
  %81 = vmatpush1.msra.mxu0 0.0
  %82 = vmatprep.subr.mxu0 0.0
  %83 = vmatpush1.msra.mxu0 0.0
  %84 = vmatprep.subr.mxu0 0.0
  %85 = vmatpush1.msra.mxu0 0.0
  %86 = vmatprep.subr.mxu0 0.0
  %87 = vmatpush1.msra.mxu0 0.0
  %88 = vmatprep.subr.mxu0 0.0
  %89 = vmatpush1.msra.mxu0 0.0
  %90 = vmatprep.subr.mxu0 0.0
  %91 = vmatpush1.msra.mxu0 0.0
  %92 = vmatprep.subr.mxu0 0.0
  %93 = vmatpush1.msra.mxu0 0.0
  %94 = vmatprep.subr.mxu0 0.0
  %95 = vmatpush1.msra.mxu0 0.0
  %96 = vmatprep.subr.mxu0 0.0
  %97 = vmatpush1.msra.mxu0 0.0
  %98 = vmatprep.subr.mxu0 0.0
  %99 = vmatpush1.msra.mxu0 0.0
  %100 = vmatprep.subr.mxu0 0.0
  %101 = vmatpush1.msra.mxu0 0.0
  %102 = vmatprep.subr.mxu0 0.0
  %103 = vmatpush1.msra.mxu0 0.0
  %104 = vmatprep.subr.mxu0 0.0
  %105 = vmatpush1.msra.mxu0 0.0
  %106 = vmatprep.subr.mxu0 0.0
  %107 = vmatpush1.msra.mxu0 0.0
  %108 = vmatprep.subr.mxu0 0.0
  %109 = vmatpush1.msra.mxu0 0.0
  %110 = vmatprep.subr.mxu0 0.0
  %111 = vmatpush1.msra.mxu0 0.0
  %112 = vmatprep.subr.mxu0 0.0
  %113 = vmatpush1.msra.mxu0 0.0
  %114 = vmatprep.subr.mxu0 0.0
  %115 = vmatpush1.msra.mxu0 0.0
  %116 = vmatprep.subr.mxu0 0.0
  %117 = vmatpush1.msra.mxu0 0.0
  %118 = vmatprep.subr.mxu0 0.0
  %119 = vmatpush1.msra.mxu0 0.0
  %120 = vmatprep.mubr.f32.mxu0 0.0
  %121 = vmatmul.mubr.f32.gmra.mrb[0].mxu0 %v54
  %v122 = vpop.f32.mrb[0].mxu0
  %v123 = vadd.f32 %v50, %v122
  %v124 = vpop.f32.mrb[0].mxu0
  %v125 = vadd.f32 %v50, %v124
  %126 = vdwg.mxu0
  %127 = vmatprep.subr.mxu0 %v36
  %128 = vmatpush1.msra.mxu0 %v35
  %129 = vmatprep.subr.mxu0 0.0
  %130 = vmatpush1.msra.mxu0 0.0
  %131 = vmatprep.subr.mxu0 0.0
  %132 = vmatpush1.msra.mxu0 0.0
  %133 = vmatprep.subr.mxu0 0.0
  %134 = vmatpush1.msra.mxu0 0.0
  %135 = vmatprep.subr.mxu0 0.0
  %136 = vmatpush1.msra.mxu0 0.0
  %137 = vmatprep.subr.mxu0 0.0
  %138 = vmatpush1.msra.mxu0 0.0
  %139 = vmatprep.subr.mxu0 0.0
  %140 = vmatpush1.msra.mxu0 0.0
  %141 = vmatprep.subr.mxu0 0.0
  %142 = vmatpush1.msra.mxu0 0.0
  %143 = vmatprep.subr.mxu0 0.0
  %144 = vmatpush1.msra.mxu0 0.0
  %145 = vmatprep.subr.mxu0 0.0
  %146 = vmatpush1.msra.mxu0 0.0
  %147 = vmatprep.subr.mxu0 0.0
  %148 = vmatpush1.msra.mxu0 0.0
  %149 = vmatprep.subr.mxu0 0.0
  %150 = vmatpush1.msra.mxu0 0.0
  %151 = vmatprep.subr.mxu0 0.0
  %152 = vmatpush1.msra.mxu0 0.0
  %153 = vmatprep.subr.mxu0 0.0
  %154 = vmatpush1.msra.mxu0 0.0
  %155 = vmatprep.subr.mxu0 0.0
  %156 = vmatpush1.msra.mxu0 0.0
  %157 = vmatprep.subr.mxu0 0.0
  %158 = vmatpush1.msra.mxu0 0.0
  %159 = vmatprep.subr.mxu0 0.0
  %160 = vmatpush1.msra.mxu0 0.0
  %161 = vmatprep.subr.mxu0 0.0
  %162 = vmatpush1.msra.mxu0 0.0
  %163 = vmatprep.subr.mxu0 0.0
  %164 = vmatpush1.msra.mxu0 0.0
  %165 = vmatprep.subr.mxu0 0.0
  %166 = vmatpush1.msra.mxu0 0.0
  %167 = vmatprep.subr.mxu0 0.0
  %168 = vmatpush1.msra.mxu0 0.0
  %169 = vmatprep.subr.mxu0 0.0
  %170 = vmatpush1.msra.mxu0 0.0
  %171 = vmatprep.subr.mxu0 0.0
  %172 = vmatpush1.msra.mxu0 0.0
  %173 = vmatprep.subr.mxu0 0.0
  %174 = vmatpush1.msra.mxu0 0.0
  %175 = vmatprep.subr.mxu0 0.0
  %176 = vmatpush1.msra.mxu0 0.0
  %177 = vmatprep.subr.mxu0 0.0
  %178 = vmatpush1.msra.mxu0 0.0
  %179 = vmatprep.subr.mxu0 0.0
  %180 = vmatpush1.msra.mxu0 0.0
  %181 = vmatprep.subr.mxu0 0.0
  %182 = vmatpush1.msra.mxu0 0.0
  %183 = vmatprep.subr.mxu0 0.0
  %184 = vmatpush1.msra.mxu0 0.0
  %185 = vmatprep.subr.mxu0 0.0
  %186 = vmatpush1.msra.mxu0 0.0
  %187 = vmatprep.subr.mxu0 0.0
  %188 = vmatpush1.msra.mxu0 0.0
  %189 = vmatprep.subr.mxu0 0.0
  %190 = vmatpush1.msra.mxu0 0.0
  %191 = vmatprep.mubr.f32.mxu0 0.0
  %192 = vmatmul.mubr.f32.gmra.mrb[0].mxu0 %v54
  %v193 = vpop.f32.mrb[0].mxu0
  %v194 = vadd.f32 %v50, %v193
  %v195 = vpop.f32.mrb[0].mxu0
  %v196 = vadd.f32 %v50, %v195
  %197 = vdwg.mxu0
  %v198 = vmax.f32 %v123, 0.0
  %v199 = vmax.f32 %v125, 0.0
  %v200 = vmax.f32 %v194, 0.0
  %v201 = vmax.f32 %v196, 0.0
  %v202 = vld [vmem:[%s4] sm:$0xff]
  %v203 = vld [vmem:[%s5] sm:$0xff]
  %204 = vrot.lane.b32.xlu0 %v198, 17
  %v205 = vpop.permute.xlu0 %204
  %206 = vrot.lane.b32.xlu0 %v199, 17
  %v207 = vpop.permute.xlu0 %206
  %208 = vrot.lane.b32.xlu0 %v200, 17
  %v209 = vpop.permute.xlu0 %208
  %210 = vrot.lane.b32.xlu0 %v201, 17
  %v211 = vpop.permute.xlu0 %210
  %v212 = vlaneseq
  %v213 = vand.u32 %v212, 127
  %vm214 = vcmp.lt.s32.totalorder %v213, 17
  %v215 = vsel %vm214, %v209, %v211
  %v216 = vsel %vm214, %v207, %v209
  %v217 = vsel %vm214, %v205, %v207
  %v218 = vsel %vm214, %v211, %v205
  %v219 = vlaneseq
  %v220 = vshrl.u32 %v219, 7
  %v221 = vsub.s32 0, %v220
  %v222 = vrot.slane %v37, %v221
  %v223 = vlaneseq
  %v224 = vshrl.u32 %v223, 7
  %v225 = vsub.s32 0, %v224
  %v226 = vrot.slane %v38, %v225
  %v227 = vlaneseq
  %v228 = vshrl.u32 %v227, 7
  %v229 = vsub.s32 0, %v228
  %v230 = vrot.slane %v39, %v229
  %v231 = vlaneseq
  %v232 = vshrl.u32 %v231, 7
  %v233 = vsub.s32 0, %v232
  %v234 = vrot.slane %v40, %v233
  %v235 = vmul.f32 %v218, %v222
  %v236 = vmul.f32 %v217, %v226
  %v237 = vmul.f32 %v216, %v230
  %v238 = vmul.f32 %v215, %v234
  %240 = vset.pattern.permute.xlu0 0
  %241 = vperm.xlu0 %240, %v202
  %v242 = vpop.permute.xlu0 %241
  %v244 = vmul.f32 %v242, %v235
  %v245 = vmul.f32 %v242, %v236
  %v246 = vmul.f32 %v242, %v237
  %v247 = vmul.f32 %v242, %v238
  %v248 = vadd.f32 %v244, 0.0
  %v249 = vadd.f32 %v245, 0.0
  %v250 = vadd.f32 %v246, 0.0
  %v251 = vadd.f32 %v247, 0.0
  %252 = vrot.lane.b32.xlu0 %v198, 16
  %v253 = vpop.permute.xlu0 %252
  %254 = vrot.lane.b32.xlu0 %v199, 16
  %v255 = vpop.permute.xlu0 %254
  %256 = vrot.lane.b32.xlu0 %v200, 16
  %v257 = vpop.permute.xlu0 %256
  %258 = vrot.lane.b32.xlu0 %v201, 16
  %v259 = vpop.permute.xlu0 %258
  %vm260 = vcmp.lt.s32.totalorder %v213, 16
  %v261 = vsel %vm260, %v257, %v259
  %v262 = vsel %vm260, %v255, %v257
  %v263 = vsel %vm260, %v253, %v255
  %v264 = vsel %vm260, %v259, %v253
  %v265 = vlaneseq
  %v266 = vshrl.u32 %v265, 7
  %v267 = vsub.s32 1, %v266
  %v268 = vrot.slane %v37, %v267
  %v269 = vlaneseq
  %v270 = vshrl.u32 %v269, 7
  %v271 = vsub.s32 1, %v270
  %v272 = vrot.slane %v38, %v271
  %v273 = vlaneseq
  %v274 = vshrl.u32 %v273, 7
  %v275 = vsub.s32 1, %v274
  %v276 = vrot.slane %v39, %v275
  %v277 = vlaneseq
  %v278 = vshrl.u32 %v277, 7
  %v279 = vsub.s32 1, %v278
  %v280 = vrot.slane %v40, %v279
  %v281 = vmul.f32 %v264, %v268
  %v282 = vmul.f32 %v263, %v272
  %v283 = vmul.f32 %v262, %v276
  %v284 = vmul.f32 %v261, %v280
  %285 = vset.pattern.permute.xlu0 1
  %286 = vperm.xlu0 %285, %v202
  %v287 = vpop.permute.xlu0 %286
  %v289 = vmul.f32 %v287, %v281
  %v290 = vmul.f32 %v287, %v282
  %v291 = vmul.f32 %v287, %v283
  %v292 = vmul.f32 %v287, %v284
  %v293 = vadd.f32 %v248, %v289
  %v294 = vadd.f32 %v249, %v290
  %v295 = vadd.f32 %v250, %v291
  %v296 = vadd.f32 %v251, %v292
  %297 = vrot.lane.b32.xlu0 %v198, 15
  %v298 = vpop.permute.xlu0 %297
  %299 = vrot.lane.b32.xlu0 %v199, 15
  %v300 = vpop.permute.xlu0 %299
  %301 = vrot.lane.b32.xlu0 %v200, 15
  %v302 = vpop.permute.xlu0 %301
  %303 = vrot.lane.b32.xlu0 %v201, 15
  %v304 = vpop.permute.xlu0 %303
  %vm305 = vcmp.lt.s32.totalorder %v213, 15
  %v306 = vsel %vm305, %v302, %v304
  %v307 = vsel %vm305, %v300, %v302
  %v308 = vsel %vm305, %v298, %v300
  %v309 = vsel %vm305, %v304, %v298
  %v310 = vlaneseq
  %v311 = vshrl.u32 %v310, 7
  %v312 = vsub.s32 2, %v311
  %v313 = vrot.slane %v37, %v312
  %v314 = vlaneseq
  %v315 = vshrl.u32 %v314, 7
  %v316 = vsub.s32 2, %v315
  %v317 = vrot.slane %v38, %v316
  %v318 = vlaneseq
  %v319 = vshrl.u32 %v318, 7
  %v320 = vsub.s32 2, %v319
  %v321 = vrot.slane %v39, %v320
  %v322 = vlaneseq
  %v323 = vshrl.u32 %v322, 7
  %v324 = vsub.s32 2, %v323
  %v325 = vrot.slane %v40, %v324
  %v326 = vmul.f32 %v309, %v313
  %v327 = vmul.f32 %v308, %v317
  %v328 = vmul.f32 %v307, %v321
  %v329 = vmul.f32 %v306, %v325
  %330 = vset.pattern.permute.xlu0 2
  %331 = vperm.xlu0 %330, %v202
  %v332 = vpop.permute.xlu0 %331
  %v334 = vmul.f32 %v332, %v326
  %v335 = vmul.f32 %v332, %v327
  %v336 = vmul.f32 %v332, %v328
  %v337 = vmul.f32 %v332, %v329
  %v338 = vadd.f32 %v293, %v334
  %v339 = vadd.f32 %v294, %v335
  %v340 = vadd.f32 %v295, %v336
  %v341 = vadd.f32 %v296, %v337
  %342 = vrot.lane.b32.xlu0 %v198, 1
  %v343 = vpop.permute.xlu0 %342
  %344 = vrot.lane.b32.xlu0 %v199, 1
  %v345 = vpop.permute.xlu0 %344
  %346 = vrot.lane.b32.xlu0 %v200, 1
  %v347 = vpop.permute.xlu0 %346
  %348 = vrot.lane.b32.xlu0 %v201, 1
  %v349 = vpop.permute.xlu0 %348
  %vm350 = vcmp.lt.s32.totalorder %v213, 1
  %v351 = vsel %vm350, %v347, %v349
  %v352 = vsel %vm350, %v345, %v347
  %v353 = vsel %vm350, %v343, %v345
  %v354 = vsel %vm350, %v349, %v343
  %v355 = vlaneseq
  %v356 = vshrl.u32 %v355, 7
  %v357 = vsub.s32 3, %v356
  %v358 = vrot.slane %v37, %v357
  %v359 = vlaneseq
  %v360 = vshrl.u32 %v359, 7
  %v361 = vsub.s32 3, %v360
  %v362 = vrot.slane %v38, %v361
  %v363 = vlaneseq
  %v364 = vshrl.u32 %v363, 7
  %v365 = vsub.s32 3, %v364
  %v366 = vrot.slane %v39, %v365
  %v367 = vlaneseq
  %v368 = vshrl.u32 %v367, 7
  %v369 = vsub.s32 3, %v368
  %v370 = vrot.slane %v40, %v369
  %v371 = vmul.f32 %v354, %v358
  %v372 = vmul.f32 %v353, %v362
  %v373 = vmul.f32 %v352, %v366
  %v374 = vmul.f32 %v351, %v370
  %375 = vset.pattern.permute.xlu0 3
  %376 = vperm.xlu0 %375, %v202
  %v377 = vpop.permute.xlu0 %376
  %v379 = vmul.f32 %v377, %v371
  %v380 = vmul.f32 %v377, %v372
  %v381 = vmul.f32 %v377, %v373
  %v382 = vmul.f32 %v377, %v374
  %v383 = vadd.f32 %v338, %v379
  %v384 = vadd.f32 %v339, %v380
  %v385 = vadd.f32 %v340, %v381
  %v386 = vadd.f32 %v341, %v382
  %387 = vset.pattern.permute.xlu0 4
  %388 = vperm.xlu0 %387, %v202
  %v389 = vpop.permute.xlu0 %388
  %v391 = vmul.f32 %v389, %v198
  %v392 = vmul.f32 %v389, %v199
  %v393 = vmul.f32 %v389, %v200
  %v394 = vmul.f32 %v389, %v201
  %v395 = vadd.f32 %v383, %v391
  %v396 = vadd.f32 %v384, %v392
  %v397 = vadd.f32 %v385, %v393
  %v398 = vadd.f32 %v386, %v394
  %399 = vrot.lane.b32.xlu0 %v198, 127
  %v400 = vpop.permute.xlu0 %399
  %401 = vrot.lane.b32.xlu0 %v199, 127
  %v402 = vpop.permute.xlu0 %401
  %403 = vrot.lane.b32.xlu0 %v200, 127
  %v404 = vpop.permute.xlu0 %403
  %405 = vrot.lane.b32.xlu0 %v201, 127
  %v406 = vpop.permute.xlu0 %405
  %vm407 = vcmp.lt.s32.totalorder %v213, 127
  %v408 = vsel %vm407, %v404, %v406
  %v409 = vsel %vm407, %v402, %v404
  %v410 = vsel %vm407, %v400, %v402
  %v411 = vsel %vm407, %v406, %v400
  %v412 = vlaneseq
  %v413 = vshrl.u32 %v412, 7
  %v414 = vsub.s32 5, %v413
  %v415 = vrot.slane %v37, %v414
  %v416 = vlaneseq
  %v417 = vshrl.u32 %v416, 7
  %v418 = vsub.s32 5, %v417
  %v419 = vrot.slane %v38, %v418
  %v420 = vlaneseq
  %v421 = vshrl.u32 %v420, 7
  %v422 = vsub.s32 5, %v421
  %v423 = vrot.slane %v39, %v422
  %v424 = vlaneseq
  %v425 = vshrl.u32 %v424, 7
  %v426 = vsub.s32 5, %v425
  %v427 = vrot.slane %v40, %v426
  %v428 = vmul.f32 %v410, %v415
  %v429 = vmul.f32 %v409, %v419
  %v430 = vmul.f32 %v408, %v423
  %v431 = vmul.f32 %v411, %v427
  %432 = vset.pattern.permute.xlu0 5
  %433 = vperm.xlu0 %432, %v202
  %v434 = vpop.permute.xlu0 %433
  %v436 = vmul.f32 %v434, %v428
  %v437 = vmul.f32 %v434, %v429
  %v438 = vmul.f32 %v434, %v430
  %v439 = vmul.f32 %v434, %v431
  %v440 = vadd.f32 %v395, %v436
  %v441 = vadd.f32 %v396, %v437
  %v442 = vadd.f32 %v397, %v438
  %v443 = vadd.f32 %v398, %v439
  %444 = vrot.lane.b32.xlu0 %v198, 113
  %v445 = vpop.permute.xlu0 %444
  %446 = vrot.lane.b32.xlu0 %v199, 113
  %v447 = vpop.permute.xlu0 %446
  %448 = vrot.lane.b32.xlu0 %v200, 113
  %v449 = vpop.permute.xlu0 %448
  %450 = vrot.lane.b32.xlu0 %v201, 113
  %v451 = vpop.permute.xlu0 %450
  %vm452 = vcmp.lt.s32.totalorder %v213, 113
  %v453 = vsel %vm452, %v449, %v451
  %v454 = vsel %vm452, %v447, %v449
  %v455 = vsel %vm452, %v445, %v447
  %v456 = vsel %vm452, %v451, %v445
  %v457 = vlaneseq
  %v458 = vshrl.u32 %v457, 7
  %v459 = vsub.s32 6, %v458
  %v460 = vrot.slane %v37, %v459
  %v461 = vlaneseq
  %v462 = vshrl.u32 %v461, 7
  %v463 = vsub.s32 6, %v462
  %v464 = vrot.slane %v38, %v463
  %v465 = vlaneseq
  %v466 = vshrl.u32 %v465, 7
  %v467 = vsub.s32 6, %v466
  %v468 = vrot.slane %v39, %v467
  %v469 = vlaneseq
  %v470 = vshrl.u32 %v469, 7
  %v471 = vsub.s32 6, %v470
  %v472 = vrot.slane %v40, %v471
  %v473 = vmul.f32 %v455, %v460
  %v474 = vmul.f32 %v454, %v464
  %v475 = vmul.f32 %v453, %v468
  %v476 = vmul.f32 %v456, %v472
  %477 = vset.pattern.permute.xlu0 6
  %478 = vperm.xlu0 %477, %v202
  %v479 = vpop.permute.xlu0 %478
  %v481 = vmul.f32 %v479, %v473
  %v482 = vmul.f32 %v479, %v474
  %v483 = vmul.f32 %v479, %v475
  %v484 = vmul.f32 %v479, %v476
  %v485 = vadd.f32 %v440, %v481
  %v486 = vadd.f32 %v441, %v482
  %v487 = vadd.f32 %v442, %v483
  %v488 = vadd.f32 %v443, %v484
  %489 = vrot.lane.b32.xlu0 %v198, 112
  %v490 = vpop.permute.xlu0 %489
  %491 = vrot.lane.b32.xlu0 %v199, 112
  %v492 = vpop.permute.xlu0 %491
  %493 = vrot.lane.b32.xlu0 %v200, 112
  %v494 = vpop.permute.xlu0 %493
  %495 = vrot.lane.b32.xlu0 %v201, 112
  %v496 = vpop.permute.xlu0 %495
  %vm497 = vcmp.lt.s32.totalorder %v213, 112
  %v498 = vsel %vm497, %v494, %v496
  %v499 = vsel %vm497, %v492, %v494
  %v500 = vsel %vm497, %v490, %v492
  %v501 = vsel %vm497, %v496, %v490
  %v502 = vlaneseq
  %v503 = vshrl.u32 %v502, 7
  %v504 = vsub.s32 7, %v503
  %v505 = vrot.slane %v37, %v504
  %v506 = vlaneseq
  %v507 = vshrl.u32 %v506, 7
  %v508 = vsub.s32 7, %v507
  %v509 = vrot.slane %v38, %v508
  %v510 = vlaneseq
  %v511 = vshrl.u32 %v510, 7
  %v512 = vsub.s32 7, %v511
  %v513 = vrot.slane %v39, %v512
  %v514 = vlaneseq
  %v515 = vshrl.u32 %v514, 7
  %v516 = vsub.s32 7, %v515
  %v517 = vrot.slane %v40, %v516
  %v518 = vmul.f32 %v500, %v505
  %v519 = vmul.f32 %v499, %v509
  %v520 = vmul.f32 %v498, %v513
  %v521 = vmul.f32 %v501, %v517
  %522 = vset.pattern.permute.xlu0 7
  %523 = vperm.xlu0 %522, %v202
  %v524 = vpop.permute.xlu0 %523
  %v526 = vmul.f32 %v524, %v518
  %v527 = vmul.f32 %v524, %v519
  %v528 = vmul.f32 %v524, %v520
  %v529 = vmul.f32 %v524, %v521
  %v530 = vadd.f32 %v485, %v526
  %v531 = vadd.f32 %v486, %v527
  %v532 = vadd.f32 %v487, %v528
  %v533 = vadd.f32 %v488, %v529
  %534 = vrot.lane.b32.xlu0 %v198, 111
  %v535 = vpop.permute.xlu0 %534
  %536 = vrot.lane.b32.xlu0 %v199, 111
  %v537 = vpop.permute.xlu0 %536
  %538 = vrot.lane.b32.xlu0 %v200, 111
  %v539 = vpop.permute.xlu0 %538
  %540 = vrot.lane.b32.xlu0 %v201, 111
  %v541 = vpop.permute.xlu0 %540
  %vm542 = vcmp.lt.s32.totalorder %v213, 111
  %v543 = vsel %vm542, %v539, %v541
  %v544 = vsel %vm542, %v537, %v539
  %v545 = vsel %vm542, %v535, %v537
  %v546 = vsel %vm542, %v541, %v535
  %v547 = vlaneseq
  %v548 = vshrl.u32 %v547, 7
  %v549 = vsub.s32 0, %v548
  %v550 = vrot.slane %v41, %v549
  %v551 = vlaneseq
  %v552 = vshrl.u32 %v551, 7
  %v553 = vsub.s32 0, %v552
  %v554 = vrot.slane %v42, %v553
  %v555 = vlaneseq
  %v556 = vshrl.u32 %v555, 7
  %v557 = vsub.s32 0, %v556
  %v558 = vrot.slane %v43, %v557
  %v559 = vlaneseq
  %v560 = vshrl.u32 %v559, 7
  %v561 = vsub.s32 0, %v560
  %v562 = vrot.slane %v44, %v561
  %v563 = vmul.f32 %v545, %v550
  %v564 = vmul.f32 %v544, %v554
  %v565 = vmul.f32 %v543, %v558
  %v566 = vmul.f32 %v546, %v562
  %567 = vset.pattern.permute.xlu0 8
  %568 = vperm.xlu0 %567, %v202
  %v569 = vpop.permute.xlu0 %568
  %v571 = vmul.f32 %v569, %v563
  %v572 = vmul.f32 %v569, %v564
  %v573 = vmul.f32 %v569, %v565
  %v574 = vmul.f32 %v569, %v566
  %v575 = vadd.f32 %v530, %v571
  %v576 = vadd.f32 %v531, %v572
  %v577 = vadd.f32 %v532, %v573
  %v578 = vadd.f32 %v533, %v574
  %580 = vset.pattern.permute.xlu0 0
  %581 = vperm.xlu0 %580, %v203
  %v582 = vpop.permute.xlu0 %581
  %v584 = vadd.f32 %v575, %v582
  %v585 = vadd.f32 %v576, %v582
  %v586 = vadd.f32 %v577, %v582
  %v587 = vadd.f32 %v578, %v582
  %v588 = vld [vmem:[%s6] sm:$0xff]
  %v589 = vld [vmem:[%s7] sm:$0xff]
  %591 = vset.pattern.permute.xlu0 0
  %592 = vperm.xlu0 %591, %v589
  %v593 = vpop.permute.xlu0 %592
  %v596 = vsel %vm52, %v588, 0
  %598 = vmatprep.subr.mxu0 %v585
  %599 = vmatpush1.msra.mxu0 %v584
  %600 = vmatprep.subr.mxu0 0.0
  %601 = vmatpush1.msra.mxu0 0.0
  %602 = vmatprep.subr.mxu0 0.0
  %603 = vmatpush1.msra.mxu0 0.0
  %604 = vmatprep.subr.mxu0 0.0
  %605 = vmatpush1.msra.mxu0 0.0
  %606 = vmatprep.subr.mxu0 0.0
  %607 = vmatpush1.msra.mxu0 0.0
  %608 = vmatprep.subr.mxu0 0.0
  %609 = vmatpush1.msra.mxu0 0.0
  %610 = vmatprep.subr.mxu0 0.0
  %611 = vmatpush1.msra.mxu0 0.0
  %612 = vmatprep.subr.mxu0 0.0
  %613 = vmatpush1.msra.mxu0 0.0
  %614 = vmatprep.subr.mxu0 0.0
  %615 = vmatpush1.msra.mxu0 0.0
  %616 = vmatprep.subr.mxu0 0.0
  %617 = vmatpush1.msra.mxu0 0.0
  %618 = vmatprep.subr.mxu0 0.0
  %619 = vmatpush1.msra.mxu0 0.0
  %620 = vmatprep.subr.mxu0 0.0
  %621 = vmatpush1.msra.mxu0 0.0
  %622 = vmatprep.subr.mxu0 0.0
  %623 = vmatpush1.msra.mxu0 0.0
  %624 = vmatprep.subr.mxu0 0.0
  %625 = vmatpush1.msra.mxu0 0.0
  %626 = vmatprep.subr.mxu0 0.0
  %627 = vmatpush1.msra.mxu0 0.0
  %628 = vmatprep.subr.mxu0 0.0
  %629 = vmatpush1.msra.mxu0 0.0
  %630 = vmatprep.subr.mxu0 0.0
  %631 = vmatpush1.msra.mxu0 0.0
  %632 = vmatprep.subr.mxu0 0.0
  %633 = vmatpush1.msra.mxu0 0.0
  %634 = vmatprep.subr.mxu0 0.0
  %635 = vmatpush1.msra.mxu0 0.0
  %636 = vmatprep.subr.mxu0 0.0
  %637 = vmatpush1.msra.mxu0 0.0
  %638 = vmatprep.subr.mxu0 0.0
  %639 = vmatpush1.msra.mxu0 0.0
  %640 = vmatprep.subr.mxu0 0.0
  %641 = vmatpush1.msra.mxu0 0.0
  %642 = vmatprep.subr.mxu0 0.0
  %643 = vmatpush1.msra.mxu0 0.0
  %644 = vmatprep.subr.mxu0 0.0
  %645 = vmatpush1.msra.mxu0 0.0
  %646 = vmatprep.subr.mxu0 0.0
  %647 = vmatpush1.msra.mxu0 0.0
  %648 = vmatprep.subr.mxu0 0.0
  %649 = vmatpush1.msra.mxu0 0.0
  %650 = vmatprep.subr.mxu0 0.0
  %651 = vmatpush1.msra.mxu0 0.0
  %652 = vmatprep.subr.mxu0 0.0
  %653 = vmatpush1.msra.mxu0 0.0
  %654 = vmatprep.subr.mxu0 0.0
  %655 = vmatpush1.msra.mxu0 0.0
  %656 = vmatprep.subr.mxu0 0.0
  %657 = vmatpush1.msra.mxu0 0.0
  %658 = vmatprep.subr.mxu0 0.0
  %659 = vmatpush1.msra.mxu0 0.0
  %660 = vmatprep.subr.mxu0 0.0
  %661 = vmatpush1.msra.mxu0 0.0
  %662 = vmatprep.mubr.f32.mxu0 0.0
  %663 = vmatmul.mubr.f32.gmra.mrb[0].mxu0 %v596
  %v664 = vpop.f32.mrb[0].mxu0
  %v665 = vadd.f32 %v593, %v664
  %v666 = vpop.f32.mrb[0].mxu0
  %v667 = vadd.f32 %v593, %v666
  %668 = vdwg.mxu0
  %669 = vmatprep.subr.mxu0 %v587
  %670 = vmatpush1.msra.mxu0 %v586
  %671 = vmatprep.subr.mxu0 0.0
  %672 = vmatpush1.msra.mxu0 0.0
  %673 = vmatprep.subr.mxu0 0.0
  %674 = vmatpush1.msra.mxu0 0.0
  %675 = vmatprep.subr.mxu0 0.0
  %676 = vmatpush1.msra.mxu0 0.0
  %677 = vmatprep.subr.mxu0 0.0
  %678 = vmatpush1.msra.mxu0 0.0
  %679 = vmatprep.subr.mxu0 0.0
  %680 = vmatpush1.msra.mxu0 0.0
  %681 = vmatprep.subr.mxu0 0.0
  %682 = vmatpush1.msra.mxu0 0.0
  %683 = vmatprep.subr.mxu0 0.0
  %684 = vmatpush1.msra.mxu0 0.0
  %685 = vmatprep.subr.mxu0 0.0
  %686 = vmatpush1.msra.mxu0 0.0
  %687 = vmatprep.subr.mxu0 0.0
  %688 = vmatpush1.msra.mxu0 0.0
  %689 = vmatprep.subr.mxu0 0.0
  %690 = vmatpush1.msra.mxu0 0.0
  %691 = vmatprep.subr.mxu0 0.0
  %692 = vmatpush1.msra.mxu0 0.0
  %693 = vmatprep.subr.mxu0 0.0
  %694 = vmatpush1.msra.mxu0 0.0
  %695 = vmatprep.subr.mxu0 0.0
  %696 = vmatpush1.msra.mxu0 0.0
  %697 = vmatprep.subr.mxu0 0.0
  %698 = vmatpush1.msra.mxu0 0.0
  %699 = vmatprep.subr.mxu0 0.0
  %700 = vmatpush1.msra.mxu0 0.0
  %701 = vmatprep.subr.mxu0 0.0
  %702 = vmatpush1.msra.mxu0 0.0
  %703 = vmatprep.subr.mxu0 0.0
  %704 = vmatpush1.msra.mxu0 0.0
  %705 = vmatprep.subr.mxu0 0.0
  %706 = vmatpush1.msra.mxu0 0.0
  %707 = vmatprep.subr.mxu0 0.0
  %708 = vmatpush1.msra.mxu0 0.0
  %709 = vmatprep.subr.mxu0 0.0
  %710 = vmatpush1.msra.mxu0 0.0
  %711 = vmatprep.subr.mxu0 0.0
  %712 = vmatpush1.msra.mxu0 0.0
  %713 = vmatprep.subr.mxu0 0.0
  %714 = vmatpush1.msra.mxu0 0.0
  %715 = vmatprep.subr.mxu0 0.0
  %716 = vmatpush1.msra.mxu0 0.0
  %717 = vmatprep.subr.mxu0 0.0
  %718 = vmatpush1.msra.mxu0 0.0
  %719 = vmatprep.subr.mxu0 0.0
  %720 = vmatpush1.msra.mxu0 0.0
  %721 = vmatprep.subr.mxu0 0.0
  %722 = vmatpush1.msra.mxu0 0.0
  %723 = vmatprep.subr.mxu0 0.0
  %724 = vmatpush1.msra.mxu0 0.0
  %725 = vmatprep.subr.mxu0 0.0
  %726 = vmatpush1.msra.mxu0 0.0
  %727 = vmatprep.subr.mxu0 0.0
  %728 = vmatpush1.msra.mxu0 0.0
  %729 = vmatprep.subr.mxu0 0.0
  %730 = vmatpush1.msra.mxu0 0.0
  %731 = vmatprep.subr.mxu0 0.0
  %732 = vmatpush1.msra.mxu0 0.0
  %733 = vmatprep.mubr.f32.mxu0 0.0
  %734 = vmatmul.mubr.f32.gmra.mrb[0].mxu0 %v596
  %v735 = vpop.f32.mrb[0].mxu0
  %v736 = vadd.f32 %v593, %v735
  %v737 = vpop.f32.mrb[0].mxu0
  %v738 = vadd.f32 %v593, %v737
  %739 = vdwg.mxu0
  %v740 = vmax.f32 %v665, 0.0
  %v741 = vmax.f32 %v667, 0.0
  %v742 = vmax.f32 %v736, 0.0
  %v743 = vmax.f32 %v738, 0.0
  %744 = vst [vmem:[%s8] sm:$0xff] %v29
  %745 = vst [vmem:[%s8 + $0x8] sm:$0xff] %v30
  %746 = vst [vmem:[%s8 + $0x10] sm:$0xff] %v31
  %747 = vst [vmem:[%s8 + $0x18] sm:$0xff] %v32
  %v748 = vadd.f32 %v740, %v33
  %v749 = vadd.f32 %v741, %v34
  %v750 = vadd.f32 %v742, %v35
  %v751 = vadd.f32 %v743, %v36
  %752 = vst [vmem:[%s8 + $0x20] sm:$0xff] %v748
  %753 = vst [vmem:[%s8 + $0x28] sm:$0xff] %v749
  %754 = vst [vmem:[%s8 + $0x30] sm:$0xff] %v750
  %755 = vst [vmem:[%s8 + $0x38] sm:$0xff] %v751
  // Predicated region
  $region34: #{shuffle_unit_forward.1} parent=0 // pred_check
    _
  $region35: #{shuffle_unit_forward.1} parent=0 // pred_check_branch
    %757 = sbr.rel (0) target = $region37
  $region36: #{shuffle_unit_forward.1} parent=0 // pred_region
    _
  $region37: #{shuffle_unit_forward.1} parent=0 // pred_fallthru
    _
  // Predicated region
  $region38: #{shuffle_unit_forward.1} parent=0 // pred_check
    _
  $region39: #{shuffle_unit_forward.1} parent=0 // pred_check_branch
    %759 = sbr.rel (0) target = $region41
  $region40: #{shuffle_unit_forward.1} parent=0 // pred_region
    _
  $region41: #{shuffle_unit_forward.1} parent=0 // pred_fallthru
    _

</llo_original>
